<compile_context>
chip_gen: v7x
topology: tpu7x:2x2x1
jax: 0.10.0
libtpu: 0.0.40
codegen_flags: <defaults>
</compile_context>

<pallas_src>
import jax
import jax.numpy as jnp
from jax.experimental import pallas as pl
from jax.experimental.pallas import tpu as pltpu


LANE = 128            # lane width of a TPU vreg (fixed across v5e/v6e/v7x)
MAX_TILE_ROWS = 2048  # 2048 x 128 f32 = 1 MiB per output block (2x buffered = 2 MiB)


def _round_up(x: int, m: int) -> int:
    return (x + m - 1) // m * m


def _choose_tile_rows(rows: int) -> int:
    """Pick the sublane tile for the (rows, 128) output.

    Rules: the tile must be a multiple of 8 or equal to `rows` (full extent).
    Keep >= 2 grid steps when possible (one block per TensorCore on v7x) and
    cap the block at ~1 MiB to amortize per-grid-step overhead without
    stressing VMEM on any generation.
    """
    if rows <= 16:
        # Tiny batch: a single full-extent block (legal even if rows % 8 != 0).
        return rows
    return min(MAX_TILE_ROWS, _round_up(pl.cdiv(rows, 2), 8))


def _single_variance_kernel(val_ref, o_ref):
    # val_ref: SMEM (1,) f32 holding exp(variance * 10.0), computed once in the
    #          wrapper (hoisted out of the grid loop).
    # o_ref:   VMEM (tile_rows, 128) lane-dense output tile -> full-width vst.
    o_ref[...] = jnp.full(o_ref.shape, val_ref[0], dtype=o_ref.dtype)


def single_variance_forward(x, variance, *, use_kernel=None, min_kernel_batch=1_000_000):
    """Pallas equivalent of SingleVarianceNetwork.forward.

    x:        any array whose leading dim is the batch size N (e.g. [N,3] or [N,C,H,W])
    variance: shape (1,) float32 parameter (the nn.Parameter)
    returns:  (N, 1) float32 = ones([N,1]) * exp(variance * 10.0)
    """
    n = x.shape[0]

    # exp(10 * s) computed once (scalar); identical math to the reference.
    fill = jnp.exp(variance.reshape(-1)[:1].astype(jnp.float32) * 10.0)  # shape (1,)

    if use_kernel is None:
        use_kernel = n >= min_kernel_batch
    if not use_kernel:
        # A zero-FLOP fill is pure HBM writeback; below huge batches a single
        # fused XLA broadcast (exact N*4 bytes, no launch/padding/slice) wins.
        return jnp.broadcast_to(fill, (n, 1)).astype(jnp.float32)

    rows = pl.cdiv(n, LANE)                 # exact lane-dense row count
    tile_rows = _choose_tile_rows(rows)
    grid_rows = pl.cdiv(rows, tile_rows)    # Pallas handles the ragged last block

    out = pl.pallas_call(
        _single_variance_kernel,
        out_shape=jax.ShapeDtypeStruct((rows, LANE), jnp.float32),
        grid_spec=pltpu.PrefetchScalarGridSpec(
            num_scalar_prefetch=0,
            grid=(grid_rows,),
            in_specs=[
                # single precomputed scalar lives in SMEM (no tiling)
                pl.BlockSpec(memory_space=pltpu.MemorySpace.SMEM),
            ],
            out_specs=pl.BlockSpec((tile_rows, LANE), lambda i: (i, 0)),
        ),
        compiler_params=pltpu.CompilerParams(
            # Blocks are independent -> shard the grid across TCs on v7x.
            dimension_semantics=("parallel",),
        ),
        cost_estimate=pl.CostEstimate(
            flops=0, transcendentals=0, bytes_accessed=rows * LANE * 4,
        ),
    )(fill)

    if rows * LANE == n:
        # Pure metadata reshape (no copy) when N is lane-aligned.
        return out.reshape(n, 1)
    # Ragged N: discard the (< 512 B) lane padding of the final row.
    return out.reshape(-1)[:n].reshape(n, 1)


if __name__ == "__main__":
    key = jax.random.PRNGKey(0)
    k_small, k_pts = jax.random.split(key)

    # Deterministic parameter init, mirroring nn.Parameter(torch.Tensor([init_val]))
    init_val = 0.3
    variance = jnp.array([init_val], dtype=jnp.float32)

    # Small NCHW-style input (only len(x) == batch dim is used).
    x_small = jax.random.normal(k_small, (2, 4, 16, 16), dtype=jnp.float32)
    # NeuS-style points input whose batch is not a multiple of 128 and spans
    # multiple grid blocks with a ragged final block.
    x_pts = jax.random.normal(k_pts, (4100, 3), dtype=jnp.float32)

    ref_val = jnp.exp(variance * 10.0)

    # Force the Pallas kernel path (auto-dispatch routes small N to plain XLA).
    out_small = jax.block_until_ready(
        single_variance_forward(x_small, variance, use_kernel=True))
    out_pts = jax.block_until_ready(
        single_variance_forward(x_pts, variance, use_kernel=True))
    # Auto-dispatch fast path for the tiny batch.
    out_fast = jax.block_until_ready(single_variance_forward(x_small, variance))

    for out, x in ((out_small, x_small), (out_pts, x_pts), (out_fast, x_small)):
        ref = jnp.ones((x.shape[0], 1), jnp.float32) * ref_val
        assert out.shape == (x.shape[0], 1), out.shape
        assert out.dtype == jnp.float32, out.dtype
        assert jnp.allclose(out, ref, rtol=1e-6, atol=1e-6)

    print("KERNEL_OK")
</pallas_src>

<mosaic_0001>
module attributes {stable_mosaic.version = 11 : i64} {
  func.func @_single_variance_kernel(%arg0: i32, %arg1: memref<1xf32, #tpu.memory_space<smem>>, %arg2: memref<1x128xf32, #tpu.memory_space<vmem>>) attributes {dimension_semantics = [#tpu.dimension_semantics<parallel>], iteration_bounds = array<i64: 1>, scalar_prefetch = 0 : i64, scratch_operands = 0 : i64, tpu.core_type = #tpu.core_type<tc>, window_params = [{transform_indices = @transform_0, window_bounds = array<i64: 1>}, {transform_indices = @transform_1, window_bounds = array<i64: 1, 128>}]} {
    %c0 = arith.constant 0 : index
    %0 = memref.load %arg1[%c0] : memref<1xf32, #tpu.memory_space<smem>>
    %1 = vector.broadcast %0 : f32 to vector<1x128xf32>
    %c0_0 = arith.constant 0 : index
    %c0_1 = arith.constant 0 : index
    %2 = vector.load %arg2[%c0_0, %c0_1] : memref<1x128xf32, #tpu.memory_space<vmem>>, vector<1x128xf32>
    tpu.vector_store %arg2[%c0_0, %c0_1], %1 {strides = array<i32>} : memref<1x128xf32, #tpu.memory_space<vmem>>, vector<1x128xf32>,
    return
  }
  func.func @transform_0(%arg0: i32) -> i32 {
    %c0_i32 = arith.constant 0 : i32
    %c0_i32_0 = arith.constant 0 : i32
    return %c0_i32 : i32
  }
  func.func @transform_1(%arg0: i32) -> (i32, i32) {
    %c0_i32 = arith.constant 0 : i32
    %c0_i32_0 = arith.constant 0 : i32
    return %arg0, %c0_i32 : i32, i32
  }
}

</mosaic_0001>

<llo_original>
// kernel: tpu_custom_call.1
$region0: #{tpu_custom_call.1}
  #allocation0 [shape = 'u32[]', space=smem, size = 0x4, offset = 0x4, fixed_abs, tag = 'smem constant byte address 0x4 - core index']
  #allocation1 [shape = 'u32[144,128]{1,0:T(1,128)}', space=vmem, size = 0x12000, scoped, tag = 'internal scratch']
  #allocation2 [shape = 'f32[1]{0:T(128)S(6)}', space=smem, size = 0x200, scoped, tag = 'scoped memory for tpu_custom_call.1']
  %s0 = inlined_call_operand.<no memory space> [shape: f32[1], index: 0, kind: input, shape index: {}]
  %s1 = inlined_call_operand.hbm [shape: f32[1,128], index: 1, kind: output, shape index: {}]
  %s2 = sld [smem:[#allocation0]]
  $region14: #{tpu_custom_call.1} parent=0
    _
  %s4 = ssub.s32 1, %s2
  %s5 = scalar_select 0, %s4, %s2
  %6 = sst [smem:[#allocation2]] %s0
  $region1: #{tpu_custom_call.1} parent=0
    #allocation3 [shape = 'u8[512]{0}', space=vmem, size = 0x400, scoped, tag = 'output window, operand 0, single buffered']
    #allocation4 [shape = 's32[1]{0}', space=sflag, size = 0x4, scoped, tag = 'scoped memory for tpu_custom_call.1']
    %7 = vsyncpa [#allocation4], 0
    // Predicated region
    $region2: #{tpu_custom_call.1} parent=1 // pred_check
      _
    $region3: #{tpu_custom_call.1} parent=1 // pred_check_branch
      %9 = sbr.rel (0) target = $region5
    $region4: #{tpu_custom_call.1} parent=1 // pred_region
      _
    $region5: #{tpu_custom_call.1} parent=1 // pred_fallthru
      _
    %s10 = sld [smem:[#allocation2]]
    %v11 = vstv %s10
    %12 = vst [vmem:[#allocation3] sm:$0x1] %v11
    // Predicated region
    $region6: #{tpu_custom_call.1} parent=1 // pred_check
      _
    $region7: #{tpu_custom_call.1} parent=1 // pred_check_branch
      %14 = sbr.rel (0) target = $region9
    $region8: #{tpu_custom_call.1} parent=1 // pred_region
      %s16 = ssub.s32 16, 16
      %17 = vsyncadd [#allocation4], %s16
      %s19 = sshll.u32 [#allocation3], 4
      %s20 = int_to_ptr.vmem [resolvable:$true] %s19
      %22 = dma.vmem_to_hbm [thread:$0]  %s20, 16, %s1, [#allocation4]
    $region9: #{tpu_custom_call.1} parent=1 // pred_fallthru
      _
    // Predicated region
    $region10: #{tpu_custom_call.1} parent=1 // pred_check
      _
    $region11: #{tpu_custom_call.1} parent=1 // pred_check_branch
      %24 = sbr.rel (0) target = $region13
    $region12: #{tpu_custom_call.1} parent=1 // pred_region
      %25 = dma.done [#allocation4], 16
    $region13: #{tpu_custom_call.1} parent=1 // pred_fallthru
      _
    %26 = vsyncpa [#allocation4], 1

</llo_original>
